<compile_context>
chip_gen: v7x
topology: tpu7x:2x2x1
jax: 0.10.0
libtpu: 0.0.40
codegen_flags: <defaults>
</compile_context>

<pallas_src>
import jax
import jax.numpy as jnp
from jax.experimental import pallas as pl
from jax.experimental.pallas import tpu as pltpu


def _gcn_kernel(x_ref, w1t_ref, b1_ref, w2blk_ref, o_ref):
    # x_ref:     (B*S, N)   f32   batch-flattened input slab
    # w1t_ref:   (N, N)     bf16  conv1 weight, pre-transposed (W1^T)
    # b1_ref:    (1, N)     f32   conv1 bias
    # w2blk_ref: (B*S, B*S) bf16  block-diagonal conv2 weight (kron(I_B, W2))
    # o_ref:     (B*S, N)   f32   output
    x = x_ref[...]                                           # f32, kept for residual

    # conv1 as one batch-fused MXU matmul: (B*S, N) @ (N, N), bf16 operands,
    # f32 accumulation.
    h = jnp.dot(x.astype(jnp.bfloat16), w1t_ref[...],
                preferred_element_type=jnp.float32)
    h = h + b1_ref[...]                                      # broadcast (1, N), f32

    # residual add + ReLU on the VPU in f32.
    h = jnp.maximum(h + x, 0.0)

    # conv2 for ALL batches as one block-diagonal MXU matmul:
    #   (B*S, B*S) @ (B*S, N); block-diag structure keeps batches independent.
    out = jnp.dot(w2blk_ref[...], h.astype(jnp.bfloat16),
                  preferred_element_type=jnp.float32)

    # single full-slab store
    o_ref[...] = out.astype(o_ref.dtype)


def gcn_forward(x, w1, b1, w2):
    """x: (B, S, N); w1: (N, N); b1: (N,); w2: (S, S) -> (B, S, N)."""
    B, S, N = x.shape
    BS = B * S

    # ---- Glue / layout work on the XLA side (constant-folded or fused) ----
    x2 = x.reshape(BS, N)                                  # free row-major flatten
    w1t = w1.T.astype(jnp.bfloat16)                        # conv1 weight, transposed
    b1_2d = b1.reshape(1, N).astype(jnp.float32)           # 2-D for TPU layout
    w2blk = jnp.kron(jnp.eye(B, dtype=w2.dtype), w2).astype(jnp.bfloat16)

    # ---- VMEM-budget guard (single-slab, grid=(1,) design) ----
    # x2 + out (f32) + weights (bf16) + bias, times 2 for double buffering.
    vmem_bytes = 2 * (4 * 2 * BS * N + 2 * (N * N + BS * BS) + 4 * N)
    assert vmem_bytes < 16 * 1024 * 1024, (
        "Slab too large for single-step VMEM residency; tile over batch "
        "(and pad node dim to a multiple of 128) instead.")
    # TODO(synk): for production-size graphs, switch to a batch-tiled grid with
    # dimension_semantics=("parallel",...) (2 TCs on v7x) and a 128-padded node
    # dim for lane-dense stores.

    # Advisory cost hint for XLA's scheduler around the custom call.
    flops = 2 * BS * N * N + 2 * BS * BS * N
    bytes_accessed = 4 * (2 * BS * N) + 2 * (N * N + BS * BS) + 4 * N
    cost = pl.CostEstimate(flops=flops, transcendentals=0,
                           bytes_accessed=bytes_accessed)

    out2 = pl.pallas_call(
        _gcn_kernel,
        out_shape=jax.ShapeDtypeStruct((BS, N), x.dtype),
        grid=(1,),                                          # single grid step
        in_specs=[
            pl.BlockSpec((BS, N), lambda i: (0, 0)),        # x (whole slab)
            pl.BlockSpec((N, N), lambda i: (0, 0)),         # W1^T (bf16)
            pl.BlockSpec((1, N), lambda i: (0, 0)),         # b1
            pl.BlockSpec((BS, BS), lambda i: (0, 0)),       # block-diag W2 (bf16)
        ],
        out_specs=pl.BlockSpec((BS, N), lambda i: (0, 0)),
        compiler_params=pltpu.CompilerParams(
            dimension_semantics=("arbitrary",),
        ),
        cost_estimate=cost,
    )(x2, w1t, b1_2d, w2blk)

    return out2.reshape(B, S, N)


def gcn_reference(x, w1, b1, w2):
    # Pure-JAX f32 reference of the PyTorch forward.
    h = jnp.einsum("bsm,nm->bsn", x, w1) + b1[None, None, :]
    h = jax.nn.relu(h + x)
    return jnp.einsum("os,bsn->bon", w2, h)


if __name__ == "__main__":
    # Shapes implied by the module: num_state=S, num_node+1=N.
    B, S, N = 2, 32, 16   # batch=2, num_state=32, num_node=15 -> num_node+1=16

    key = jax.random.PRNGKey(0)
    kx, kw1, kb1, kw2 = jax.random.split(key, 4)

    x = jax.random.normal(kx, (B, S, N), dtype=jnp.float32)
    # Deterministic synthetic parameters (Conv1d k=1 weights squeezed to 2-D).
    w1 = jax.random.normal(kw1, (N, N), dtype=jnp.float32) * (1.0 / N) ** 0.5
    b1 = jax.random.normal(kb1, (N,), dtype=jnp.float32) * 0.1
    w2 = jax.random.normal(kw2, (S, S), dtype=jnp.float32) * (1.0 / S) ** 0.5

    out = gcn_forward(x, w1, b1, w2)
    jax.block_until_ready(out)

    ref = gcn_reference(x, w1, b1, w2)
    assert out.shape == (B, S, N)
    # Tolerance accounts for bf16 MXU operands (f32 accumulation); outputs are
    # O(1) so 5e-2 abs/rel comfortably bounds bf16 rounding while still
    # catching any semantic error.
    assert jnp.allclose(out, ref, atol=5e-2, rtol=5e-2), "mismatch vs reference"

    print("KERNEL_OK")
</pallas_src>

<mosaic_0001>
module attributes {stable_mosaic.version = 11 : i64} {
  func.func @_gcn_kernel(%arg0: i32, %arg1: memref<64x16xf32, #tpu.memory_space<vmem>>, %arg2: memref<16x16xbf16, #tpu.memory_space<vmem>>, %arg3: memref<1x16xf32, #tpu.memory_space<vmem>>, %arg4: memref<64x64xbf16, #tpu.memory_space<vmem>>, %arg5: memref<64x16xf32, #tpu.memory_space<vmem>>) attributes {dimension_semantics = [#tpu.dimension_semantics<arbitrary>], iteration_bounds = array<i64: 1>, scalar_prefetch = 0 : i64, scratch_operands = 0 : i64, tpu.core_type = #tpu.core_type<tc>, window_params = [{pipeline_mode = #tpu.pipeline_mode<synchronous>, transform_indices = @transform_0, window_bounds = array<i64: 64, 16>}, {pipeline_mode = #tpu.pipeline_mode<synchronous>, transform_indices = @transform_1, window_bounds = array<i64: 16, 16>}, {pipeline_mode = #tpu.pipeline_mode<synchronous>, transform_indices = @transform_2, window_bounds = array<i64: 1, 16>}, {pipeline_mode = #tpu.pipeline_mode<synchronous>, transform_indices = @transform_3, window_bounds = array<i64: 64, 64>}, {pipeline_mode = #tpu.pipeline_mode<synchronous>, transform_indices = @transform_4, window_bounds = array<i64: 64, 16>}]} {
    %c0 = arith.constant 0 : index
    %c0_0 = arith.constant 0 : index
    %0 = vector.load %arg1[%c0, %c0_0] : memref<64x16xf32, #tpu.memory_space<vmem>>, vector<64x16xf32>
    %1 = arith.truncf %0 : vector<64x16xf32> to vector<64x16xbf16>
    %c0_1 = arith.constant 0 : index
    %c0_2 = arith.constant 0 : index
    %2 = vector.load %arg2[%c0_1, %c0_2] : memref<16x16xbf16, #tpu.memory_space<vmem>>, vector<16x16xbf16>
    %cst = arith.constant dense<0.000000e+00> : vector<64x16xf32>
    %3 = tpu.matmul %1, %2, %cst {dimension_numbers = #tpu.dot_dimension_numbers<[1], [0], [0], [1], [0, 0, 1, 1], [], []>} : vector<64x16xbf16>, vector<16x16xbf16>, vector<64x16xf32> -> vector<64x16xf32>
    %c0_3 = arith.constant 0 : index
    %c0_4 = arith.constant 0 : index
    %4 = vector.load %arg3[%c0_3, %c0_4] : memref<1x16xf32, #tpu.memory_space<vmem>>, vector<1x16xf32>
    %5 = vector.broadcast %4 : vector<1x16xf32> to vector<64x16xf32>
    %6 = arith.addf %3, %5 : vector<64x16xf32>
    %7 = arith.addf %6, %0 : vector<64x16xf32>
    %cst_5 = arith.constant 0.000000e+00 : f32
    %8 = vector.broadcast %cst_5 : f32 to vector<64x16xf32>
    %9 = arith.maximumf %7, %8 : vector<64x16xf32>
    %c0_6 = arith.constant 0 : index
    %c0_7 = arith.constant 0 : index
    %10 = vector.load %arg4[%c0_6, %c0_7] : memref<64x64xbf16, #tpu.memory_space<vmem>>, vector<64x64xbf16>
    %11 = arith.truncf %9 : vector<64x16xf32> to vector<64x16xbf16>
    %cst_8 = arith.constant dense<0.000000e+00> : vector<64x16xf32>
    %12 = tpu.matmul %10, %11, %cst_8 {dimension_numbers = #tpu.dot_dimension_numbers<[1], [0], [0], [1], [0, 0, 1, 1], [], []>} : vector<64x64xbf16>, vector<64x16xbf16>, vector<64x16xf32> -> vector<64x16xf32>
    %c0_9 = arith.constant 0 : index
    %c0_10 = arith.constant 0 : index
    %13 = vector.load %arg5[%c0_9, %c0_10] : memref<64x16xf32, #tpu.memory_space<vmem>>, vector<64x16xf32>
    tpu.vector_store %arg5[%c0_9, %c0_10], %12 {strides = array<i32>} : memref<64x16xf32, #tpu.memory_space<vmem>>, vector<64x16xf32>,
    return
  }
  func.func @transform_0(%arg0: i32) -> (i32, i32) {
    %c0_i32 = arith.constant 0 : i32
    %c0_i32_0 = arith.constant 0 : i32
    %c0_i32_1 = arith.constant 0 : i32
    return %c0_i32, %c0_i32_0 : i32, i32
  }
  func.func @transform_1(%arg0: i32) -> (i32, i32) {
    %c0_i32 = arith.constant 0 : i32
    %c0_i32_0 = arith.constant 0 : i32
    %c0_i32_1 = arith.constant 0 : i32
    return %c0_i32, %c0_i32_0 : i32, i32
  }
  func.func @transform_2(%arg0: i32) -> (i32, i32) {
    %c0_i32 = arith.constant 0 : i32
    %c0_i32_0 = arith.constant 0 : i32
    %c0_i32_1 = arith.constant 0 : i32
    return %c0_i32, %c0_i32_0 : i32, i32
  }
  func.func @transform_3(%arg0: i32) -> (i32, i32) {
    %c0_i32 = arith.constant 0 : i32
    %c0_i32_0 = arith.constant 0 : i32
    %c0_i32_1 = arith.constant 0 : i32
    return %c0_i32, %c0_i32_0 : i32, i32
  }
  func.func @transform_4(%arg0: i32) -> (i32, i32) {
    %c0_i32 = arith.constant 0 : i32
    %c0_i32_0 = arith.constant 0 : i32
    %c0_i32_1 = arith.constant 0 : i32
    return %c0_i32, %c0_i32_0 : i32, i32
  }
}

</mosaic_0001>

<llo_original>
// kernel: tpu_custom_call.1
$region0: #{tpu_custom_call.1}
  #allocation0 [shape = 'u32[]', space=smem, size = 0x4, offset = 0x4, fixed_abs, tag = 'smem constant byte address 0x4 - core index']
  #allocation1 [shape = 'u32[144,128]{1,0:T(1,128)}', space=vmem, size = 0x12000, scoped, tag = 'internal scratch']
  %s0 = inlined_call_operand.vmem [shape: f32[64,16], index: 0, kind: input, shape index: {}]
  %s1 = inlined_call_operand.vmem [shape: bf16[16,16], index: 1, kind: input, shape index: {}]
  %s2 = inlined_call_operand.vmem [shape: f32[1,16], index: 2, kind: input, shape index: {}]
  %s3 = inlined_call_operand.vmem [shape: bf16[64,64], index: 3, kind: input, shape index: {}]
  %s4 = inlined_call_operand.vmem [shape: f32[64,16], index: 4, kind: output, shape index: {}]
  %s5 = sld [smem:[#allocation0]]
  $region26: #{tpu_custom_call.1} parent=0
    _
  %s7 = ssub.s32 1, %s5
  %s8 = scalar_select 0, %s7, %s5
  // Predicated region
  $region2: #{tpu_custom_call.1} parent=0 // pred_check
    _
  $region3: #{tpu_custom_call.1} parent=0 // pred_check_branch
    %10 = sbr.rel (0) target = $region5
  $region4: #{tpu_custom_call.1} parent=0 // pred_region
    _
  $region5: #{tpu_custom_call.1} parent=0 // pred_fallthru
    _
  // Predicated region
  $region6: #{tpu_custom_call.1} parent=0 // pred_check
    _
  $region7: #{tpu_custom_call.1} parent=0 // pred_check_branch
    %12 = sbr.rel (0) target = $region9
  $region8: #{tpu_custom_call.1} parent=0 // pred_region
    _
  $region9: #{tpu_custom_call.1} parent=0 // pred_fallthru
    _
  // Predicated region
  $region10: #{tpu_custom_call.1} parent=0 // pred_check
    _
  $region11: #{tpu_custom_call.1} parent=0 // pred_check_branch
    %14 = sbr.rel (0) target = $region13
  $region12: #{tpu_custom_call.1} parent=0 // pred_region
    _
  $region13: #{tpu_custom_call.1} parent=0 // pred_fallthru
    _
  // Predicated region
  $region14: #{tpu_custom_call.1} parent=0 // pred_check
    _
  $region15: #{tpu_custom_call.1} parent=0 // pred_check_branch
    %16 = sbr.rel (0) target = $region17
  $region16: #{tpu_custom_call.1} parent=0 // pred_region
    _
  $region17: #{tpu_custom_call.1} parent=0 // pred_fallthru
    _
  %v18 = vld [vmem:[%s0] sm:$0xff]
  %v19 = vld [vmem:[%s0 + $0x8] sm:$0xff]
  %v20 = vld [vmem:[%s0 + $0x10] sm:$0xff]
  %v21 = vld [vmem:[%s0 + $0x18] sm:$0xff]
  %v22 = vld [vmem:[%s0 + $0x20] sm:$0xff]
  %v23 = vld [vmem:[%s0 + $0x28] sm:$0xff]
  %v24 = vld [vmem:[%s0 + $0x30] sm:$0xff]
  %v25 = vld [vmem:[%s0 + $0x38] sm:$0xff]
  %v26 = vpack.c.bf16 %v19, %v18
  %v27 = vpack.c.bf16 %v21, %v20
  %v28 = vpack.c.bf16 %v23, %v22
  %v29 = vpack.c.bf16 %v25, %v24
  %v30 = vld [vmem:[%s1] sm:$0xf]
  %v31 = vld [vmem:[%s1 + $0x4] sm:$0xf]
  %v32 = vld [vmem:[%s2] sm:$0x1]
  %v34 = vlaneseq
  %v35 = vshrl.u32 %v34, 7
  %v36 = vsub.s32 0, %v35
  %v37 = vrot.slane %v32, %v36
  %v41 = vunpack.c.l.b16 %v30
  %v42 = vunpack.c.l.b16 %v31
  %v43 = vpack.c.b16 %v42, %v41
  %vm45 = vcmask 130048
  %v47 = vsel %vm45, %v26, 0
  %v50 = vsel %vm45, %v27, 0
  %v53 = vsel %vm45, %v28, 0
  %v56 = vsel %vm45, %v29, 0
  %58 = vmatprep.subr.bf16.mxu0 0
  %59 = vmatpush1.bf16.msra.mxu0 %v43
  %60 = vmatprep.subr.bf16.mxu0 0
  %61 = vmatpush1.bf16.msra.mxu0 0
  %62 = vmatprep.subr.bf16.mxu0 0
  %63 = vmatpush1.bf16.msra.mxu0 0
  %64 = vmatprep.subr.bf16.mxu0 0
  %65 = vmatpush1.bf16.msra.mxu0 0
  %66 = vmatprep.subr.bf16.mxu0 0
  %67 = vmatpush1.bf16.msra.mxu0 0
  %68 = vmatprep.subr.bf16.mxu0 0
  %69 = vmatpush1.bf16.msra.mxu0 0
  %70 = vmatprep.subr.bf16.mxu0 0
  %71 = vmatpush1.bf16.msra.mxu0 0
  %72 = vmatprep.subr.bf16.mxu0 0
  %73 = vmatpush1.bf16.msra.mxu0 0
  %74 = vmatprep.subr.bf16.mxu0 0
  %75 = vmatpush1.bf16.msra.mxu0 0
  %76 = vmatprep.subr.bf16.mxu0 0
  %77 = vmatpush1.bf16.msra.mxu0 0
  %78 = vmatprep.subr.bf16.mxu0 0
  %79 = vmatpush1.bf16.msra.mxu0 0
  %80 = vmatprep.subr.bf16.mxu0 0
  %81 = vmatpush1.bf16.msra.mxu0 0
  %82 = vmatprep.subr.bf16.mxu0 0
  %83 = vmatpush1.bf16.msra.mxu0 0
  %84 = vmatprep.subr.bf16.mxu0 0
  %85 = vmatpush1.bf16.msra.mxu0 0
  %86 = vmatprep.subr.bf16.mxu0 0
  %87 = vmatpush1.bf16.msra.mxu0 0
  %88 = vmatprep.subr.bf16.mxu0 0
  %89 = vmatpush1.bf16.msra.mxu0 0
  %90 = vmatprep.mubr.bf16.mxu0 0
  %91 = vmatmul.mubr.bf16.gmra.mrb[0].mxu0 %v47
  %v92 = vpop.f32.mrb[0].mxu0
  %v93 = vadd.f32 %v37, %v92
  %v94 = vpop.f32.mrb[0].mxu0
  %v95 = vpop.f32.mrb[0].mxu0
  %v96 = vadd.f32 %v37, %v95
  %v97 = vpop.f32.mrb[0].mxu0
  %98 = vmatprep.mubr.bf16.mxu0 0
  %99 = vmatmul.mubr.bf16.gmra.mrb[0].mxu0 %v50
  %v100 = vpop.f32.mrb[0].mxu0
  %v101 = vadd.f32 %v37, %v100
  %v102 = vpop.f32.mrb[0].mxu0
  %v103 = vpop.f32.mrb[0].mxu0
  %v104 = vadd.f32 %v37, %v103
  %v105 = vpop.f32.mrb[0].mxu0
  %106 = vmatprep.mubr.bf16.mxu0 0
  %107 = vmatmul.mubr.bf16.gmra.mrb[0].mxu0 %v53
  %v108 = vpop.f32.mrb[0].mxu0
  %v109 = vadd.f32 %v37, %v108
  %v110 = vpop.f32.mrb[0].mxu0
  %v111 = vpop.f32.mrb[0].mxu0
  %v112 = vadd.f32 %v37, %v111
  %v113 = vpop.f32.mrb[0].mxu0
  %114 = vmatprep.mubr.bf16.mxu0 0
  %115 = vmatmul.mubr.bf16.gmra.mrb[0].mxu0 %v56
  %v116 = vpop.f32.mrb[0].mxu0
  %v117 = vadd.f32 %v37, %v116
  %v118 = vpop.f32.mrb[0].mxu0
  %v119 = vpop.f32.mrb[0].mxu0
  %v120 = vadd.f32 %v37, %v119
  %v121 = vpop.f32.mrb[0].mxu0
  %122 = vdwg.mxu0
  %v123 = vadd.f32 %v93, %v18
  %v124 = vadd.f32 %v96, %v19
  %v125 = vadd.f32 %v101, %v20
  %v126 = vadd.f32 %v104, %v21
  %v127 = vadd.f32 %v109, %v22
  %v128 = vadd.f32 %v112, %v23
  %v129 = vadd.f32 %v117, %v24
  %v130 = vadd.f32 %v120, %v25
  %v131 = vmax.f32 %v123, 0.0
  %v132 = vmax.f32 %v124, 0.0
  %v133 = vmax.f32 %v125, 0.0
  %v134 = vmax.f32 %v126, 0.0
  %v135 = vmax.f32 %v127, 0.0
  %v136 = vmax.f32 %v128, 0.0
  %v137 = vmax.f32 %v129, 0.0
  %v138 = vmax.f32 %v130, 0.0
  %v139 = vld [vmem:[%s3] sm:$0xf]
  %v140 = vld [vmem:[%s3 + $0x4] sm:$0xf]
  %v141 = vld [vmem:[%s3 + $0x8] sm:$0xf]
  %v142 = vld [vmem:[%s3 + $0xc] sm:$0xf]
  %v143 = vld [vmem:[%s3 + $0x10] sm:$0xf]
  %v144 = vld [vmem:[%s3 + $0x14] sm:$0xf]
  %v145 = vld [vmem:[%s3 + $0x18] sm:$0xf]
  %v146 = vld [vmem:[%s3 + $0x1c] sm:$0xf]
  %v147 = vpack.c.bf16 %v132, %v131
  %v148 = vpack.c.bf16 %v134, %v133
  %v149 = vpack.c.bf16 %v136, %v135
  %v150 = vpack.c.bf16 %v138, %v137
  %v159 = vunpack.c.l.b16 %v139
  %v160 = vunpack.c.l.b16 %v140
  %v161 = vunpack.c.l.b16 %v141
  %v162 = vunpack.c.l.b16 %v142
  %v163 = vunpack.c.l.b16 %v143
  %v164 = vunpack.c.l.b16 %v144
  %v165 = vunpack.c.l.b16 %v145
  %v166 = vunpack.c.l.b16 %v146
  %v167 = vpack.c.b16 %v160, %v159
  %v168 = vpack.c.b16 %v162, %v161
  %v169 = vpack.c.b16 %v164, %v163
  %v170 = vpack.c.b16 %v166, %v165
  %vm171 = vcmask 523264
  %v173 = vsel %vm171, %v167, 0
  %v176 = vsel %vm171, %v168, 0
  %v179 = vsel %vm171, %v169, 0
  %v182 = vsel %vm171, %v170, 0
  %184 = vmatprep.subr.bf16.mxu0 0
  %185 = vmatpush1.bf16.msra.mxu0 %v147
  %186 = vmatprep.subr.bf16.mxu0 0
  %187 = vmatpush1.bf16.msra.mxu0 %v148
  %188 = vmatprep.subr.bf16.mxu0 0
  %189 = vmatpush1.bf16.msra.mxu0 %v149
  %190 = vmatprep.subr.bf16.mxu0 0
  %191 = vmatpush1.bf16.msra.mxu0 %v150
  %192 = vmatprep.subr.bf16.mxu0 0
  %193 = vmatpush1.bf16.msra.mxu0 0
  %194 = vmatprep.subr.bf16.mxu0 0
  %195 = vmatpush1.bf16.msra.mxu0 0
  %196 = vmatprep.subr.bf16.mxu0 0
  %197 = vmatpush1.bf16.msra.mxu0 0
  %198 = vmatprep.subr.bf16.mxu0 0
  %199 = vmatpush1.bf16.msra.mxu0 0
  %200 = vmatprep.subr.bf16.mxu0 0
  %201 = vmatpush1.bf16.msra.mxu0 0
  %202 = vmatprep.subr.bf16.mxu0 0
  %203 = vmatpush1.bf16.msra.mxu0 0
  %204 = vmatprep.subr.bf16.mxu0 0
  %205 = vmatpush1.bf16.msra.mxu0 0
  %206 = vmatprep.subr.bf16.mxu0 0
  %207 = vmatpush1.bf16.msra.mxu0 0
  %208 = vmatprep.subr.bf16.mxu0 0
  %209 = vmatpush1.bf16.msra.mxu0 0
  %210 = vmatprep.subr.bf16.mxu0 0
  %211 = vmatpush1.bf16.msra.mxu0 0
  %212 = vmatprep.subr.bf16.mxu0 0
  %213 = vmatpush1.bf16.msra.mxu0 0
  %214 = vmatprep.subr.bf16.mxu0 0
  %215 = vmatpush1.bf16.msra.mxu0 0
  %216 = vmatprep.mubr.bf16.mxu0 0
  %217 = vmatmul.mubr.bf16.gmra.mrb[0].mxu0 %v173
  %v218 = vpop.f32.mrb[0].mxu0
  %v219 = vadd.f32 0.0, %v218
  %v220 = vpop.f32.mrb[0].mxu0
  %v221 = vpop.f32.mrb[0].mxu0
  %v222 = vadd.f32 0.0, %v221
  %v223 = vpop.f32.mrb[0].mxu0
  %224 = vmatprep.mubr.bf16.mxu0 0
  %225 = vmatmul.mubr.bf16.gmra.mrb[0].mxu0 %v176
  %v226 = vpop.f32.mrb[0].mxu0
  %v227 = vadd.f32 0.0, %v226
  %v228 = vpop.f32.mrb[0].mxu0
  %v229 = vpop.f32.mrb[0].mxu0
  %v230 = vadd.f32 0.0, %v229
  %v231 = vpop.f32.mrb[0].mxu0
  %232 = vmatprep.mubr.bf16.mxu0 0
  %233 = vmatmul.mubr.bf16.gmra.mrb[0].mxu0 %v179
  %v234 = vpop.f32.mrb[0].mxu0
  %v235 = vadd.f32 0.0, %v234
  %v236 = vpop.f32.mrb[0].mxu0
  %v237 = vpop.f32.mrb[0].mxu0
  %v238 = vadd.f32 0.0, %v237
  %v239 = vpop.f32.mrb[0].mxu0
  %240 = vmatprep.mubr.bf16.mxu0 0
  %241 = vmatmul.mubr.bf16.gmra.mrb[0].mxu0 %v182
  %v242 = vpop.f32.mrb[0].mxu0
  %v243 = vadd.f32 0.0, %v242
  %v244 = vpop.f32.mrb[0].mxu0
  %v245 = vpop.f32.mrb[0].mxu0
  %v246 = vadd.f32 0.0, %v245
  %v247 = vpop.f32.mrb[0].mxu0
  %248 = vdwg.mxu0
  %249 = vst.msk [vmem:[%s4] sm:$0xff] %vm45, %v219
  %250 = vst.msk [vmem:[%s4 + $0x8] sm:$0xff] %vm45, %v222
  %251 = vst.msk [vmem:[%s4 + $0x10] sm:$0xff] %vm45, %v227
  %252 = vst.msk [vmem:[%s4 + $0x18] sm:$0xff] %vm45, %v230
  %253 = vst.msk [vmem:[%s4 + $0x20] sm:$0xff] %vm45, %v235
  %254 = vst.msk [vmem:[%s4 + $0x28] sm:$0xff] %vm45, %v238
  %255 = vst.msk [vmem:[%s4 + $0x30] sm:$0xff] %vm45, %v243
  %256 = vst.msk [vmem:[%s4 + $0x38] sm:$0xff] %vm45, %v246
  // Predicated region
  $region18: #{tpu_custom_call.1} parent=0 // pred_check
    _
  $region19: #{tpu_custom_call.1} parent=0 // pred_check_branch
    %258 = sbr.rel (0) target = $region21
  $region20: #{tpu_custom_call.1} parent=0 // pred_region
    _
  $region21: #{tpu_custom_call.1} parent=0 // pred_fallthru
    _
  // Predicated region
  $region22: #{tpu_custom_call.1} parent=0 // pred_check
    _
  $region23: #{tpu_custom_call.1} parent=0 // pred_check_branch
    %260 = sbr.rel (0) target = $region25
  $region24: #{tpu_custom_call.1} parent=0 // pred_region
    _
  $region25: #{tpu_custom_call.1} parent=0 // pred_fallthru
    _

</llo_original>
